<compile_context>
chip_gen: v5e
topology: v5e:2x2
jax: 0.10.0
libtpu: 0.0.40
codegen_flags: <defaults>
</compile_context>

<pallas_src>
import functools

import jax
import jax.numpy as jnp
from jax.experimental import pallas as pl
from jax.experimental.pallas import tpu as pltpu


# Per-block element caps: ~3-4 live f32 tile-sized intermediates plus
# 2 inputs x 2 pipeline buffers must stay comfortably under the 48 MiB
# vmem_limit (v7x only has 64 MiB physical VMEM).
_MAX_TILE_ELEMS = 768 * 1024          # ~3 MiB f32-equivalent per input block
_MAX_FULL_BLOCK_ELEMS = 1024 * 1024   # above this, fall back to plain JAX


# ---------------------------------------------------------------------------
# Fused multi-scale loss-sum kernel (cached per static configuration)
# ---------------------------------------------------------------------------

@functools.lru_cache(maxsize=None)
def _msrec_sums_call(nc, h, w, tile_h, num_scales, loss_type, itemsize):
    tiles_per_image = h // tile_h

    def elem_loss(d):
        if loss_type == 'l1':
            return jnp.abs(d)
        if loss_type == 'l2':
            return d * d
        # 'smoothl1' (PyTorch default beta = 1.0)
        ad = jnp.abs(d)
        return jnp.where(ad < 1.0, 0.5 * d * d, ad - 0.5)

    def kernel(p_ref, g_ref, out_ref):
        j = pl.program_id(1)

        @pl.when(j == 0)
        def _init():
            out_ref[0, 0, 0] = jnp.float32(0.0)
            out_ref[0, 0, 1] = jnp.float32(0.0)
            out_ref[0, 0, 2] = jnp.float32(0.0)

        # d = pred - gt for this tile; every scale is derived from it in VMEM.
        d = p_ref[0].astype(jnp.float32) - g_ref[0].astype(jnp.float32)
        out_ref[0, 0, 0] += jnp.sum(elem_loss(d))

        if num_scales >= 2:
            # Skinny parity masks (broadcast in the multiply): no full-tile
            # mask arrays are materialized, so VPU cost and VMEM pressure stay
            # tiny.  elem_loss(0) == 0, so masking before the loss is exact.
            col = jax.lax.broadcasted_iota(jnp.int32, (1, w), 1)
            row = jax.lax.broadcasted_iota(jnp.int32, (tile_h, 1), 0)

            # 2x2 average pool, kept dilated: roll by +1 (jnp.roll semantics:
            # out[c] = in[c-1]) puts the valid 2x2 block average of
            # d[2i:2i+2, 2j:2j+2] at position (2i+1, 2j+1).  Wrapped values
            # only ever land on unselected (even) rows/cols.
            t = d + jnp.roll(d, 1, axis=1)                 # lane pair sums
            p1 = 0.25 * (t + jnp.roll(t, 1, axis=0))       # sublane pair sums
            cm1 = (col & 1).astype(jnp.float32)            # odd columns
            rm1 = (row & 1).astype(jnp.float32)            # odd rows
            out_ref[0, 0, 1] += jnp.sum(elem_loss(p1 * cm1 * rm1))

            if num_scales >= 3:
                # Second 2x2 pool of the dilated level-1 values (stride 2 in
                # the dilated frame): valid 4x4 averages land at
                # rows/cols == 3 (mod 4).
                t2 = p1 + jnp.roll(p1, 2, axis=1)
                p2 = 0.25 * (t2 + jnp.roll(t2, 2, axis=0))
                cm2 = ((col & 3) == 3).astype(jnp.float32)
                rm2 = ((row & 3) == 3).astype(jnp.float32)
                out_ref[0, 0, 2] += jnp.sum(elem_loss(p2 * cm2 * rm2))

    total = nc * h * w
    cost = pl.CostEstimate(
        flops=(2 + 6 * (num_scales - 1)) * total,
        transcendentals=0,
        bytes_accessed=2 * total * itemsize + nc * 3 * 4,
    )

    return pl.pallas_call(
        kernel,
        out_shape=jax.ShapeDtypeStruct((nc, 1, 3), jnp.float32),
        grid_spec=pltpu.PrefetchScalarGridSpec(
            num_scalar_prefetch=0,
            grid=(nc, tiles_per_image),
            in_specs=[
                pl.BlockSpec((1, tile_h, w), lambda i, j: (i, j, 0)),
                pl.BlockSpec((1, tile_h, w), lambda i, j: (i, j, 0)),
            ],
            # Per-image (1,1,3) SMEM accumulator block keyed on grid axis 0:
            # axis 0 can be sharded across the two v7x TensorCores.
            out_specs=pl.BlockSpec((1, 1, 3), lambda i, j: (i, 0, 0),
                                   memory_space=pltpu.MemorySpace.SMEM),
        ),
        compiler_params=pltpu.CompilerParams(
            dimension_semantics=("parallel", "arbitrary"),
            vmem_limit_bytes=48 * 1024 * 1024,   # < 64 MiB physical on v7x
        ),
        cost_estimate=cost,
    )


def _pick_tile_h(nc, h, w, required_div, sublane_mult):
    """Largest row tile that divides H, is a multiple of the dtype's packed
    sublane tile (and hence of the 4-row pooling group), keeps one input
    block <= ~3 MiB f32-equivalent and leaves >= ~8 grid steps for the
    BlockSpec double-buffering to hide DMAs.  Falls back to the full H."""
    by_vmem = max(1, _MAX_TILE_ELEMS // max(1, w))
    by_steps = max(1, (nc * h) // 8)
    target_rows = max(sublane_mult, min(by_vmem, by_steps))
    tile_h = h                                   # full-H block is layout-legal
    for t in range(sublane_mult, h + 1, sublane_mult):
        if h % t == 0 and t % required_div == 0 and t <= target_rows:
            tile_h = t
    return tile_h


# ---------------------------------------------------------------------------
# Plain-JAX reference (correctness check + fallback for ragged shapes)
# ---------------------------------------------------------------------------

def _reference_loss(pred, gt, weights, loss_type):
    def criterion(a, b):
        d = a - b
        if loss_type == 'l1':
            return jnp.mean(jnp.abs(d))
        if loss_type == 'l2':
            return jnp.mean(d * d)
        ad = jnp.abs(d)
        return jnp.mean(jnp.where(ad < 1.0, 0.5 * d * d, ad - 0.5))

    def avgpool2x2(x):
        n, c, h, w = x.shape
        x = x[:, :, : (h // 2) * 2, : (w // 2) * 2]
        x = x.reshape(n, c, h // 2, 2, w // 2, 2)
        return x.mean(axis=(3, 5))

    loss = jnp.float32(0.0)
    p, g = pred, gt
    for i, wt in enumerate(weights):
        loss = loss + wt * criterion(p, g)
        if i != len(weights) - 1:
            p, g = avgpool2x2(p), avgpool2x2(g)
    return loss


# ---------------------------------------------------------------------------
# Public API (mirrors the PyTorch module)
# ---------------------------------------------------------------------------

def multiscale_rec_loss(pred, gt, *, scale=3, rec_loss_type='l1',
                        multiscale=True):
    if rec_loss_type not in ('l1', 'smoothl1', 'l2'):
        raise NotImplementedError(
            'Loss [{}] is not implemented'.format(rec_loss_type))
    pred = jnp.asarray(pred)
    gt = jnp.asarray(gt)
    assert pred.shape == gt.shape and pred.ndim == 4, 'expected NCHW inputs'

    weights = ([1.0, 1.0 / 2, 1.0 / 4][:scale]) if multiscale else [1.0]
    num_scales = len(weights)
    n, c, h, w = pred.shape
    required_div = 1 << (num_scales - 1)        # 1, 2 or 4
    itemsize = jnp.dtype(pred.dtype).itemsize

    if (h % required_div) or (w % required_div):
        # TODO(synk): odd H/W (AvgPool2d drops the trailing row/column) is not
        # handled by the fused tile-local kernel; use the plain-JAX reference.
        return _reference_loss(pred, gt, weights, rec_loss_type)

    nc = n * c
    sublane_mult = {4: 8, 2: 16, 1: 32}.get(itemsize, 8)
    tile_h = _pick_tile_h(nc, h, w, required_div, sublane_mult)
    if tile_h * w > _MAX_FULL_BLOCK_ELEMS:
        # TODO(synk): H without a suitable divisor and a huge row size would
        # blow the VMEM budget; fall back rather than risk a VMEM OOM.
        return _reference_loss(pred, gt, weights, rec_loss_type)

    # TODO(synk): for narrow images (W < 128) a lane-dense (nc, h*w//128, 128)
    # view would recover wasted lane/DMA width; not implemented here.
    p3 = pred.reshape(nc, h, w)     # free views of contiguous NCHW data
    g3 = gt.reshape(nc, h, w)
    per_image = _msrec_sums_call(nc, h, w, tile_h, num_scales, rec_loss_type,
                                 itemsize)(p3, g3)
    sums = jnp.sum(per_image.reshape(nc, 3), axis=0)

    # Per-scale mean reduction + multiscale weighting (a handful of scalars).
    loss = jnp.float32(0.0)
    sh, sw = h, w
    for i, wt in enumerate(weights):
        loss = loss + jnp.float32(wt) * sums[i] / jnp.float32(nc * sh * sw)
        sh, sw = sh // 2, sw // 2
    return loss


class MultiscaleRecLoss:
    """Pallas port of the PyTorch MultiscaleRecLoss module (NCHW inputs)."""

    def __init__(self, scale=3, rec_loss_type='l1', multiscale=True):
        if rec_loss_type not in ('l1', 'smoothl1', 'l2'):
            raise NotImplementedError(
                'Loss [{}] is not implemented'.format(rec_loss_type))
        self.multiscale = multiscale
        self.rec_loss_type = rec_loss_type
        self.scale = scale
        self.weights = ([1.0, 1.0 / 2, 1.0 / 4][:scale]) if multiscale \
            else [1.0]

    def __call__(self, input, target):
        return multiscale_rec_loss(input, target, scale=self.scale,
                                   rec_loss_type=self.rec_loss_type,
                                   multiscale=self.multiscale)


# ---------------------------------------------------------------------------

if __name__ == "__main__":
    key = jax.random.PRNGKey(0)
    k1, k2, k3, k4 = jax.random.split(key, 4)
    pred = jax.random.uniform(k1, (2, 4, 16, 16), dtype=jnp.float32)
    target = jax.random.uniform(k2, (2, 4, 16, 16), dtype=jnp.float32)

    loss_fn = MultiscaleRecLoss(scale=3, rec_loss_type='l1', multiscale=True)
    loss = loss_fn(pred, target)
    jax.block_until_ready(loss)
    ref = _reference_loss(pred, target, loss_fn.weights, 'l1')
    assert jnp.allclose(loss, ref, rtol=1e-5, atol=1e-5), (float(loss),
                                                           float(ref))

    # Second shape: H=12 has no multiple-of-8 divisor, exercising the
    # full-image-rows (1, H, W) block path.
    pred2 = jax.random.uniform(k3, (1, 3, 12, 16), dtype=jnp.float32)
    target2 = jax.random.uniform(k4, (1, 3, 12, 16), dtype=jnp.float32)
    loss2 = loss_fn(pred2, target2)
    jax.block_until_ready(loss2)
    ref2 = _reference_loss(pred2, target2, loss_fn.weights, 'l1')
    assert jnp.allclose(loss2, ref2, rtol=1e-5, atol=1e-5), (float(loss2),
                                                             float(ref2))

    # SmoothL1 variant exercises the where-based elementwise loss.
    loss_fn3 = MultiscaleRecLoss(scale=3, rec_loss_type='smoothl1')
    loss3 = loss_fn3(pred, target)
    jax.block_until_ready(loss3)
    ref3 = _reference_loss(pred, target, loss_fn3.weights, 'smoothl1')
    assert jnp.allclose(loss3, ref3, rtol=1e-5, atol=1e-5), (float(loss3),
                                                             float(ref3))

    print("KERNEL_OK")
</pallas_src>

<mosaic_0001>
module attributes {stable_mosaic.version = 11 : i64} {
  func.func @kernel(%arg0: i32, %arg1: i32, %arg2: memref<1x16x16xf32, #tpu.memory_space<vmem>>, %arg3: memref<1x16x16xf32, #tpu.memory_space<vmem>>, %arg4: memref<1x1x3xf32, #tpu.memory_space<smem>>) attributes {dimension_semantics = [#tpu.dimension_semantics<parallel>, #tpu.dimension_semantics<arbitrary>], iteration_bounds = array<i64: 8, 1>, scalar_prefetch = 0 : i64, scratch_operands = 0 : i64, tpu.core_type = #tpu.core_type<tc>, window_params = [{transform_indices = @transform_0, window_bounds = array<i64: 1, 16, 16>}, {transform_indices = @transform_1, window_bounds = array<i64: 1, 16, 16>}, {transform_indices = @transform_2, window_bounds = array<i64: 1, 1, 3>}]} {
    %c0_i32 = arith.constant 0 : i32
    %0 = arith.cmpi eq, %arg1, %c0_i32 : i32
    %1 = arith.extui %0 : i1 to i32
    %c0_i32_0 = arith.constant 0 : i32
    %2 = arith.cmpi ne, %1, %c0_i32_0 : i32
    scf.if %2 {
      %cst_30 = arith.constant 0.000000e+00 : f32
      %c0_31 = arith.constant 0 : index
      %c0_32 = arith.constant 0 : index
      %c0_33 = arith.constant 0 : index
      %80 = memref.load %arg4[%c0_31, %c0_32, %c0_33] : memref<1x1x3xf32, #tpu.memory_space<smem>>
      memref.store %cst_30, %arg4[%c0_31, %c0_32, %c0_33] : memref<1x1x3xf32, #tpu.memory_space<smem>>
      %cst_34 = arith.constant 0.000000e+00 : f32
      %c0_35 = arith.constant 0 : index
      %c0_36 = arith.constant 0 : index
      %c1_37 = arith.constant 1 : index
      %81 = memref.load %arg4[%c0_35, %c0_36, %c1_37] : memref<1x1x3xf32, #tpu.memory_space<smem>>
      memref.store %cst_34, %arg4[%c0_35, %c0_36, %c1_37] : memref<1x1x3xf32, #tpu.memory_space<smem>>
      %cst_38 = arith.constant 0.000000e+00 : f32
      %c0_39 = arith.constant 0 : index
      %c0_40 = arith.constant 0 : index
      %c2_41 = arith.constant 2 : index
      %82 = memref.load %arg4[%c0_39, %c0_40, %c2_41] : memref<1x1x3xf32, #tpu.memory_space<smem>>
      memref.store %cst_38, %arg4[%c0_39, %c0_40, %c2_41] : memref<1x1x3xf32, #tpu.memory_space<smem>>
    } else {
    }
    %c0 = arith.constant 0 : index
    %c0_1 = arith.constant 0 : index
    %c0_2 = arith.constant 0 : index
    %3 = vector.load %arg2[%c0, %c0_1, %c0_2] : memref<1x16x16xf32, #tpu.memory_space<vmem>>, vector<1x16x16xf32>
    %4 = vector.shape_cast %3 : vector<1x16x16xf32> to vector<16x16xf32>
    %c0_3 = arith.constant 0 : index
    %c0_4 = arith.constant 0 : index
    %c0_5 = arith.constant 0 : index
    %5 = vector.load %arg3[%c0_3, %c0_4, %c0_5] : memref<1x16x16xf32, #tpu.memory_space<vmem>>, vector<1x16x16xf32>
    %6 = vector.shape_cast %5 : vector<1x16x16xf32> to vector<16x16xf32>
    %7 = arith.subf %4, %6 : vector<16x16xf32>
    %c0_6 = arith.constant 0 : index
    %c0_7 = arith.constant 0 : index
    %c0_8 = arith.constant 0 : index
    %8 = memref.load %arg4[%c0_6, %c0_7, %c0_8] : memref<1x1x3xf32, #tpu.memory_space<smem>>
    %9 = math.absf %7 : vector<16x16xf32>
    %10 = vector.shape_cast %9 : vector<16x16xf32> to vector<1x16x16xf32>
    %cst = arith.constant dense<0.000000e+00> : vector<1xf32>
    %11 = vector.multi_reduction <add>, %10, %cst [1, 2] : vector<1x16x16xf32> to vector<1xf32>
    %12 = vector.shape_cast %11 : vector<1xf32> to vector<1x1x1xf32>
    %13 = vector.extract %12[0, 0, 0] : f32 from vector<1x1x1xf32>
    %14 = arith.addf %8, %13 : f32
    %c0_9 = arith.constant 0 : index
    %c0_10 = arith.constant 0 : index
    %c0_11 = arith.constant 0 : index
    %15 = memref.load %arg4[%c0_9, %c0_10, %c0_11] : memref<1x1x3xf32, #tpu.memory_space<smem>>
    memref.store %14, %arg4[%c0_9, %c0_10, %c0_11] : memref<1x1x3xf32, #tpu.memory_space<smem>>
    %16 = tpu.iota {dimensions = array<i32: 1>} : vector<1x16xi32>
    %17 = tpu.iota {dimensions = array<i32: 0>} : vector<16x1xi32>
    %18 = vector.extract_strided_slice %7 {offsets = [0, 15], sizes = [16, 1], strides = [1, 1]} : vector<16x16xf32> to vector<16x1xf32>
    %19 = vector.extract_strided_slice %7 {offsets = [0, 0], sizes = [16, 15], strides = [1, 1]} : vector<16x16xf32> to vector<16x15xf32>
    %20 = tpu.concatenate %18, %19 in 1 : vector<16x1xf32>, vector<16x15xf32> -> vector<16x16xf32>
    %21 = arith.addf %7, %20 : vector<16x16xf32>
    %22 = vector.extract_strided_slice %21 {offsets = [15, 0], sizes = [1, 16], strides = [1, 1]} : vector<16x16xf32> to vector<1x16xf32>
    %23 = vector.extract_strided_slice %21 {offsets = [0, 0], sizes = [15, 16], strides = [1, 1]} : vector<16x16xf32> to vector<15x16xf32>
    %24 = tpu.concatenate %22, %23 in 0 : vector<1x16xf32>, vector<15x16xf32> -> vector<16x16xf32>
    %25 = arith.addf %21, %24 : vector<16x16xf32>
    %cst_12 = arith.constant 2.500000e-01 : f32
    %26 = vector.broadcast %cst_12 : f32 to vector<16x16xf32>
    %27 = arith.mulf %26, %25 : vector<16x16xf32>
    %c1_i32 = arith.constant 1 : i32
    %28 = vector.broadcast %c1_i32 : i32 to vector<1x16xi32>
    %29 = arith.andi %16, %28 : vector<1x16xi32>
    %30 = arith.sitofp %29 : vector<1x16xi32> to vector<1x16xf32>
    %c1_i32_13 = arith.constant 1 : i32
    %31 = vector.broadcast %c1_i32_13 : i32 to vector<16x1xi32>
    %32 = arith.andi %17, %31 : vector<16x1xi32>
    %33 = arith.sitofp %32 : vector<16x1xi32> to vector<16x1xf32>
    %c0_14 = arith.constant 0 : index
    %c0_15 = arith.constant 0 : index
    %c1 = arith.constant 1 : index
    %34 = memref.load %arg4[%c0_14, %c0_15, %c1] : memref<1x1x3xf32, #tpu.memory_space<smem>>
    %35 = vector.broadcast %30 : vector<1x16xf32> to vector<16x16xf32>
    %36 = arith.mulf %27, %35 : vector<16x16xf32>
    %37 = vector.broadcast %33 : vector<16x1xf32> to vector<16x16xf32>
    %38 = arith.mulf %36, %37 : vector<16x16xf32>
    %39 = math.absf %38 : vector<16x16xf32>
    %40 = vector.shape_cast %39 : vector<16x16xf32> to vector<1x16x16xf32>
    %cst_16 = arith.constant dense<0.000000e+00> : vector<1xf32>
    %41 = vector.multi_reduction <add>, %40, %cst_16 [1, 2] : vector<1x16x16xf32> to vector<1xf32>
    %42 = vector.shape_cast %41 : vector<1xf32> to vector<1x1x1xf32>
    %43 = vector.extract %42[0, 0, 0] : f32 from vector<1x1x1xf32>
    %44 = arith.addf %34, %43 : f32
    %c0_17 = arith.constant 0 : index
    %c0_18 = arith.constant 0 : index
    %c1_19 = arith.constant 1 : index
    %45 = memref.load %arg4[%c0_17, %c0_18, %c1_19] : memref<1x1x3xf32, #tpu.memory_space<smem>>
    memref.store %44, %arg4[%c0_17, %c0_18, %c1_19] : memref<1x1x3xf32, #tpu.memory_space<smem>>
    %46 = vector.extract_strided_slice %27 {offsets = [0, 14], sizes = [16, 2], strides = [1, 1]} : vector<16x16xf32> to vector<16x2xf32>
    %47 = vector.extract_strided_slice %27 {offsets = [0, 0], sizes = [16, 14], strides = [1, 1]} : vector<16x16xf32> to vector<16x14xf32>
    %48 = tpu.concatenate %46, %47 in 1 : vector<16x2xf32>, vector<16x14xf32> -> vector<16x16xf32>
    %49 = arith.addf %27, %48 : vector<16x16xf32>
    %50 = vector.extract_strided_slice %49 {offsets = [14, 0], sizes = [2, 16], strides = [1, 1]} : vector<16x16xf32> to vector<2x16xf32>
    %51 = vector.extract_strided_slice %49 {offsets = [0, 0], sizes = [14, 16], strides = [1, 1]} : vector<16x16xf32> to vector<14x16xf32>
    %52 = tpu.concatenate %50, %51 in 0 : vector<2x16xf32>, vector<14x16xf32> -> vector<16x16xf32>
    %53 = arith.addf %49, %52 : vector<16x16xf32>
    %cst_20 = arith.constant 2.500000e-01 : f32
    %54 = vector.broadcast %cst_20 : f32 to vector<16x16xf32>
    %55 = arith.mulf %54, %53 : vector<16x16xf32>
    %c3_i32 = arith.constant 3 : i32
    %56 = vector.broadcast %c3_i32 : i32 to vector<1x16xi32>
    %57 = arith.andi %16, %56 : vector<1x16xi32>
    %c3_i32_21 = arith.constant 3 : i32
    %58 = vector.broadcast %c3_i32_21 : i32 to vector<1x16xi32>
    %59 = arith.cmpi eq, %57, %58 : vector<1x16xi32>
    %60 = arith.extui %59 : vector<1x16xi1> to vector<1x16xi32>
    %61 = arith.sitofp %60 : vector<1x16xi32> to vector<1x16xf32>
    %c3_i32_22 = arith.constant 3 : i32
    %62 = vector.broadcast %c3_i32_22 : i32 to vector<16x1xi32>
    %63 = arith.andi %17, %62 : vector<16x1xi32>
    %c3_i32_23 = arith.constant 3 : i32
    %64 = vector.broadcast %c3_i32_23 : i32 to vector<16x1xi32>
    %65 = arith.cmpi eq, %63, %64 : vector<16x1xi32>
    %66 = arith.extui %65 : vector<16x1xi1> to vector<16x1xi32>
    %67 = arith.sitofp %66 : vector<16x1xi32> to vector<16x1xf32>
    %c0_24 = arith.constant 0 : index
    %c0_25 = arith.constant 0 : index
    %c2 = arith.constant 2 : index
    %68 = memref.load %arg4[%c0_24, %c0_25, %c2] : memref<1x1x3xf32, #tpu.memory_space<smem>>
    %69 = vector.broadcast %61 : vector<1x16xf32> to vector<16x16xf32>
    %70 = arith.mulf %55, %69 : vector<16x16xf32>
    %71 = vector.broadcast %67 : vector<16x1xf32> to vector<16x16xf32>
    %72 = arith.mulf %70, %71 : vector<16x16xf32>
    %73 = math.absf %72 : vector<16x16xf32>
    %74 = vector.shape_cast %73 : vector<16x16xf32> to vector<1x16x16xf32>
    %cst_26 = arith.constant dense<0.000000e+00> : vector<1xf32>
    %75 = vector.multi_reduction <add>, %74, %cst_26 [1, 2] : vector<1x16x16xf32> to vector<1xf32>
    %76 = vector.shape_cast %75 : vector<1xf32> to vector<1x1x1xf32>
    %77 = vector.extract %76[0, 0, 0] : f32 from vector<1x1x1xf32>
    %78 = arith.addf %68, %77 : f32
    %c0_27 = arith.constant 0 : index
    %c0_28 = arith.constant 0 : index
    %c2_29 = arith.constant 2 : index
    %79 = memref.load %arg4[%c0_27, %c0_28, %c2_29] : memref<1x1x3xf32, #tpu.memory_space<smem>>
    memref.store %78, %arg4[%c0_27, %c0_28, %c2_29] : memref<1x1x3xf32, #tpu.memory_space<smem>>
    return
  }
  func.func @transform_0(%arg0: i32, %arg1: i32) -> (i32, i32, i32) {
    %c0_i32 = arith.constant 0 : i32
    %c0_i32_0 = arith.constant 0 : i32
    return %arg0, %arg1, %c0_i32 : i32, i32, i32
  }
  func.func @transform_1(%arg0: i32, %arg1: i32) -> (i32, i32, i32) {
    %c0_i32 = arith.constant 0 : i32
    %c0_i32_0 = arith.constant 0 : i32
    return %arg0, %arg1, %c0_i32 : i32, i32, i32
  }
  func.func @transform_2(%arg0: i32, %arg1: i32) -> (i32, i32, i32) {
    %c0_i32 = arith.constant 0 : i32
    %c0_i32_0 = arith.constant 0 : i32
    %c0_i32_1 = arith.constant 0 : i32
    return %arg0, %c0_i32, %c0_i32_0 : i32, i32, i32
  }
}

</mosaic_0001>

<llo_original>
// kernel: tpu_custom_call.1
$region0: #{tpu_custom_call.1}
  #allocation0 [shape = 'u32[]', space=smem, size = 0x4, offset = 0x4, fixed_abs, tag = 'smem constant byte address 0x4 - core index']
  #allocation1 [shape = 'u32[72,128]{1,0:T(1,128)}', space=vmem, size = 0x9000, scoped, tag = 'internal scratch']
  %s0 = inlined_call_operand.hbm [shape: f32[8,16,16], index: 0, kind: input, shape index: {}]
  %s1 = inlined_call_operand.hbm [shape: f32[8,16,16], index: 1, kind: input, shape index: {}]
  %s2 = inlined_call_operand.vmem [shape: f32[8,1,3], index: 2, kind: output, shape index: {}]
  %s3 = sld [smem:[#allocation0]]
  $region53: #{tpu_custom_call.1} parent=0
    _
  %s5 = ssub.s32 1, %s3
  %s6 = scalar_select 0, %s5, %s3
  $region1: #{tpu_custom_call.1} parent=0
    #allocation2 [shape = 'u8[16384]{0}', space=vmem, size = 0x4000, scoped, tag = 'input window, operand 0']
    #allocation3 [shape = 's32[2]{0}', space=sflag, size = 0x8, scoped, tag = 'scoped memory for tpu_custom_call.1']
    #allocation4 [shape = 's32[2]{0}', space=sflag, size = 0x8, scoped, tag = 'scoped memory for tpu_custom_call.1']
    #allocation5 [shape = 'u8[16384]{0}', space=vmem, size = 0x4000, scoped, tag = 'input window, operand 1']
    #allocation6 [shape = 's32[2]{0}', space=sflag, size = 0x8, scoped, tag = 'scoped memory for tpu_custom_call.1']
    #allocation7 [shape = 'u8[1024]{0}', space=smem, size = 0x400, scoped, tag = 'output window, operand 0']
    %7 = vsyncpa [#allocation3], 0
    %s8 = scalar_lea.sflag [#allocation3], 1
    %9 = vsyncpa %s8, 0
    %10 = vsyncpa [#allocation6], 0
    %s11 = scalar_lea.sflag [#allocation6], 1
    %12 = vsyncpa %s11, 0
    %13 = vsyncpa [#allocation4], 0
    %s14 = scalar_lea.sflag [#allocation4], 1
    %15 = vsyncpa %s14, 0
    loop: start=0, step=1, limit=10
    $region2: #{tpu_custom_call.1} parent=1 // loop_pre_header
      _
    $region3: #{tpu_custom_call.1} parent=1 // loop_header
      %s17 = sphi 0, %s21
      %p18 = scmp.ge.s32.totalorder %s17, 10
      %s24 = sphi 0, %s36
      %s25 = sphi 0, %s32
      %s26 = sphi 0, %s24
      %s27 = sphi 0, %s25
      %s28 = sphi 0, %s26
      %s29 = sphi 0, %s27
      %s41 = sphi 0, %s43
      %s44 = sphi 0, %s41
      %s45 = sphi 0, %s44
      %s61 = sphi 0, %s45
      %s69 = sphi 0, %s71
      %s72 = sphi 0, %s69
      %s73 = sphi 0, %s72
      %s89 = sphi 0, %s73
      %s95 = sphi 0, %s97
      %s98 = sphi 0, %s95
      %s99 = sphi 0, %s98
      %s115 = sphi 0, %s99
    $region4: #{tpu_custom_call.1} parent=1 // loop_header_branch
      %20 = sbr.rel (%p18) target = $region8
    $region5: #{tpu_custom_call.1} parent=1 // loop_body
      %s22 = ssub.s32 %s17, 1
      %s23 = ssub.s32 %s17, 2
      %s30 = sadd.s32 1, %s25
      %p31 = scmp.ge.s32.totalorder %s30, 1
      %s32 = scalar_select %p31, 0, %s30
      %s33 = sadd.s32 1, %s24
      %s34 = scalar_select %p31, %s33, %s24
      %p35 = scmp.ge.s32.totalorder %s34, 8
      %s36 = scalar_select %p35, 0, %s34
      %s37 = ssub.s32 %s24, %s36
      %s38 = ssub.s32 %s25, %s32
      %s39 = sor.u32 %s37, %s38
      %p40 = scmp.eq.s32.totalorder %s39, 0
      %s42 = sadd.s32 %s41, 1
      %s43 = scalar_select %p40, %s41, %s42
      %p46 = pneg %p40
      %p47 = scmp.eq.s32.totalorder %s17, 7
      %p48 = por %p46, %p47
      %p49 = scmp.ne.s32.totalorder %s41, %s44
      %p50 = scmp.eq.s32.totalorder %s17, 0
      %p51 = por %p49, %p50
      %p52 = scmp.ne.s32.totalorder %s41, %s44
      %p53 = scmp.eq.s32.totalorder %s22, 7
      %p54 = por %p52, %p53
      %p55 = scmp.ne.s32.totalorder %s44, %s45
      %p56 = scmp.eq.s32.totalorder %s22, 0
      %p57 = por %p55, %p56
      %p58 = scmp.ne.s32.totalorder %s44, %s45
      %p59 = scmp.eq.s32.totalorder %s23, 7
      %p60 = por %p58, %p59
      %p62 = scmp.ne.s32.totalorder %s45, %s61
      %p63 = scmp.eq.s32.totalorder %s23, 0
      %p64 = por %p62, %p63
      %s65 = ssub.s32 %s24, %s36
      %s66 = ssub.s32 %s25, %s32
      %s67 = sor.u32 %s65, %s66
      %p68 = scmp.eq.s32.totalorder %s67, 0
      %s70 = sadd.s32 %s69, 1
      %s71 = scalar_select %p68, %s69, %s70
      %p74 = pneg %p68
      %p75 = scmp.eq.s32.totalorder %s17, 7
      %p76 = por %p74, %p75
      %p77 = scmp.ne.s32.totalorder %s69, %s72
      %p78 = scmp.eq.s32.totalorder %s17, 0
      %p79 = por %p77, %p78
      %p80 = scmp.ne.s32.totalorder %s69, %s72
      %p81 = scmp.eq.s32.totalorder %s22, 7
      %p82 = por %p80, %p81
      %p83 = scmp.ne.s32.totalorder %s72, %s73
      %p84 = scmp.eq.s32.totalorder %s22, 0
      %p85 = por %p83, %p84
      %p86 = scmp.ne.s32.totalorder %s72, %s73
      %p87 = scmp.eq.s32.totalorder %s23, 7
      %p88 = por %p86, %p87
      %p90 = scmp.ne.s32.totalorder %s73, %s89
      %p91 = scmp.eq.s32.totalorder %s23, 0
      %p92 = por %p90, %p91
      %s93 = ssub.s32 %s24, %s36
      %p94 = scmp.eq.s32.totalorder %s93, 0
      %s96 = sadd.s32 %s95, 1
      %s97 = scalar_select %p94, %s95, %s96
      %p100 = pneg %p94
      %p101 = scmp.eq.s32.totalorder %s17, 7
      %p102 = por %p100, %p101
      %p103 = scmp.ne.s32.totalorder %s95, %s98
      %p104 = scmp.eq.s32.totalorder %s17, 0
      %p105 = por %p103, %p104
      %p106 = scmp.ne.s32.totalorder %s95, %s98
      %p107 = scmp.eq.s32.totalorder %s22, 7
      %p108 = por %p106, %p107
      %p109 = scmp.ne.s32.totalorder %s98, %s99
      %p110 = scmp.eq.s32.totalorder %s22, 0
      %p111 = por %p109, %p110
      %p112 = scmp.ne.s32.totalorder %s98, %s99
      %p113 = scmp.eq.s32.totalorder %s23, 7
      %p114 = por %p112, %p113
      %p116 = scmp.ne.s32.totalorder %s99, %s115
      %p117 = scmp.eq.s32.totalorder %s23, 0
      %p118 = por %p116, %p117
      %p119 = scmp.le.s32.totalorder 1, %s17
      %p120 = scmp.lt.s32.totalorder %s17, 9
      %p121 = pnand %p119, %p120
      %p122 = pneg %p121
      // Predicated region
      $region9: #{tpu_custom_call.1} parent=5 // pred_check
        _
      $region10: #{tpu_custom_call.1} parent=5 // pred_check_branch
        %124 = sbr.rel (%p121) target = $region12
      $region11: #{tpu_custom_call.1} parent=5 // pred_region
        %s125 = ssub.s32 %s17, 1
      $region12: #{tpu_custom_call.1} parent=5 // pred_fallthru
        _
      %p126 = scmp.lt.s32.totalorder %s17, 8
      // Predicated region
      $region13: #{tpu_custom_call.1} parent=5 // pred_check
        %p127 = pneg %p126
      $region14: #{tpu_custom_call.1} parent=5 // pred_check_branch
        %129 = sbr.rel (%p127) target = $region16
      $region15: #{tpu_custom_call.1} parent=5 // pred_region
        // Predicated region
        $region17: #{tpu_custom_call.1} parent=15 // pred_check
          %p130 = pneg %p51
        $region18: #{tpu_custom_call.1} parent=15 // pred_check_branch
          %132 = sbr.rel (%p130) target = $region20
        $region19: #{tpu_custom_call.1} parent=15 // pred_region
          %s133 = sand.u32 %s41, 1
          %s134 = scalar_lea.sflag [#allocation3], %s133
          %s135 = sand.u32 %s41, 1
          %s136 = smul.addr %s135, 16
          %s137 = scalar_lea.vmem [#allocation2], %s136
          %s138 = smul.u32 2, %s25
          %140 = vsyncadd %s134, 0
          %s141 = smul.addr %s24, 2
          %s142 = sadd.s32 %s138, %s141
          %s143 = smul.addr %s142, 8
          %s144 = scalar_lea.hbm %s0, %s143
          %s145 = sshll.u32 %s144, 4
          %s146 = int_to_ptr.hbm [resolvable:$true] %s145
          %s147 = sshll.u32 %s137, 4
          %s148 = int_to_ptr.vmem [resolvable:$true] %s147
          %153 = dma.hbm_to_vmem [thread:$0]  %s146, 256, %s148, %s134, 128, 128, 8
        $region20: #{tpu_custom_call.1} parent=15 // pred_fallthru
          _
        // Predicated region
        $region21: #{tpu_custom_call.1} parent=15 // pred_check
          %p154 = pneg %p79
        $region22: #{tpu_custom_call.1} parent=15 // pred_check_branch
          %156 = sbr.rel (%p154) target = $region24
        $region23: #{tpu_custom_call.1} parent=15 // pred_region
          %s157 = sand.u32 %s69, 1
          %s158 = scalar_lea.sflag [#allocation6], %s157
          %s159 = sand.u32 %s69, 1
          %s160 = smul.addr %s159, 16
          %s161 = scalar_lea.vmem [#allocation5], %s160
          %s162 = smul.u32 2, %s25
          %164 = vsyncadd %s158, 0
          %s165 = smul.addr %s24, 2
          %s166 = sadd.s32 %s162, %s165
          %s167 = smul.addr %s166, 8
          %s168 = scalar_lea.hbm %s1, %s167
          %s169 = sshll.u32 %s168, 4
          %s170 = int_to_ptr.hbm [resolvable:$true] %s169
          %s171 = sshll.u32 %s161, 4
          %s172 = int_to_ptr.vmem [resolvable:$true] %s171
          %177 = dma.hbm_to_vmem [thread:$0]  %s170, 256, %s172, %s158, 128, 128, 8
        $region24: #{tpu_custom_call.1} parent=15 // pred_fallthru
          _
      $region16: #{tpu_custom_call.1} parent=5 // pred_fallthru
        _
      %p178 = scmp.le.s32.totalorder 1, %s17
      %p179 = scmp.lt.s32.totalorder %s17, 9
      %p180 = pnand %p178, %p179
      %p181 = pneg %p180
      // Predicated region
      $region25: #{tpu_custom_call.1} parent=5 // pred_check
        _
      $region26: #{tpu_custom_call.1} parent=5 // pred_check_branch
        %183 = sbr.rel (%p180) target = $region28
      $region27: #{tpu_custom_call.1} parent=5 // pred_region
        %s184 = ssub.s32 %s17, 1
        %s185 = sand.u32 %s44, 1
        %s186 = scalar_lea.sflag [#allocation3], %s185
        %s187 = sand.u32 %s44, 1
        %s188 = smul.addr %s187, 16
        %s189 = scalar_lea.vmem [#allocation2], %s188
        // Predicated region
        $region29: #{tpu_custom_call.1} parent=27 // pred_check
          %p190 = pneg %p57
        $region30: #{tpu_custom_call.1} parent=27 // pred_check_branch
          %192 = sbr.rel (%p190) target = $region32
        $region31: #{tpu_custom_call.1} parent=27 // pred_region
          %194 = dma.done %s186, 256
        $region32: #{tpu_custom_call.1} parent=27 // pred_fallthru
          _
        %s195 = sand.u32 %s72, 1
        %s196 = scalar_lea.sflag [#allocation6], %s195
        %s197 = sand.u32 %s72, 1
        %s198 = smul.addr %s197, 16
        %s199 = scalar_lea.vmem [#allocation5], %s198
        // Predicated region
        $region33: #{tpu_custom_call.1} parent=27 // pred_check
          %p200 = pneg %p85
        $region34: #{tpu_custom_call.1} parent=27 // pred_check_branch
          %202 = sbr.rel (%p200) target = $region36
        $region35: #{tpu_custom_call.1} parent=27 // pred_region
          %204 = dma.done %s196, 256
        $region36: #{tpu_custom_call.1} parent=27 // pred_fallthru
          _
        %s205 = sand.u32 %s44, 1
        %s206 = scalar_lea.sflag [#allocation3], %s205
        %s207 = sand.u32 %s44, 1
        %s208 = smul.addr %s207, 16
        %s209 = scalar_lea.vmem [#allocation2], %s208
        %p210 = pneg %p57
        %p211 = pneg %p54
        %s212 = sand.u32 %s72, 1
        %s213 = scalar_lea.sflag [#allocation6], %s212
        %s214 = sand.u32 %s72, 1
        %s215 = smul.addr %s214, 16
        %s216 = scalar_lea.vmem [#allocation5], %s215
        %p217 = pneg %p85
        %p218 = pneg %p82
        %p219 = pneg %p111
        %p220 = pneg %p108
        %s221 = sand.u32 %s98, 1
        %s222 = scalar_lea.sflag [#allocation4], %s221
        %s223 = sand.u32 %s98, 1
        %s224 = smul.addr %s223, 128
        %s225 = scalar_lea.smem [#allocation7], %s224
        %s226 = smul.u32 2, %s27
        %s227 = smul.u32 2, %s27
        %p228 = scmp.eq.s32.totalorder %s27, 0
        // Predicated region
        $region37: #{tpu_custom_call.1} parent=27 // pred_check
          %p229 = pneg %p228
        $region38: #{tpu_custom_call.1} parent=27 // pred_check_branch
          %231 = sbr.rel (%p229) target = $region40
        $region39: #{tpu_custom_call.1} parent=27 // pred_region
          %s232 = scalar_lea.smem %s225, 0 [#allocation7]
          %233 = sst [smem:[%s232]] 0.0
          %s234 = scalar_lea.smem %s225, 1 [#allocation7]
          %235 = sst [smem:[%s234]] 0.0
          %s236 = scalar_lea.smem %s225, 2 [#allocation7]
          %237 = sst [smem:[%s236]] 0.0
        $region40: #{tpu_custom_call.1} parent=27 // pred_fallthru
          _
        %v238 = vld [vmem:[%s189] sm:$0xff]
        %v239 = vld [vmem:[%s189 + $0x8] sm:$0xff]
        %v240 = vld [vmem:[%s199] sm:$0xff]
        %v241 = vld [vmem:[%s199 + $0x8] sm:$0xff]
        %v242 = vsub.f32 %v238, %v240
        %v243 = vsub.f32 %v239, %v241
        %s244 = sld [smem:[%s225]]
        %v245 = vand.u32 2147483647, %v242
        %v246 = vand.u32 2147483647, %v243
        %vm247 = vcmask 130048
        %v248 = vsel %vm247, %v245, 0.0
        %v249 = vsel %vm247, %v246, 0.0
        %v250 = vadd.f32 %v248, %v249
        %251 = vadd.xlane.f32.xlu0 %v250
        %v252 = vpop.xlane.xlu0 %251
        %v253 = vrot.slane %v252, 4
        %v254 = vadd.f32 %v252, %v253
        %v255 = vrot.slane %v254, 2
        %v256 = vadd.f32 %v254, %v255
        %v257 = vrot.slane %v256, 1
        %v258 = vadd.f32 %v256, %v257
        %s259 = vtos %v258
        %s260 = sadd.f32 %s244, %s259
        %s261 = scalar_lea.smem %s225, 0 [#allocation7]
        %262 = sst [smem:[%s261]] %s260
        %v263 = vlaneseq
        %v264 = vand.u32 %v263, 127
        %v265 = vlaneseq
        %v266 = vshrl.u32 %v265, 7
        %v267 = vadd.s32 %v266, 8
        %270 = vrot.lane.b32.xlu0 %v242, 113
        %v271 = vpop.permute.xlu0 %270
        %272 = vrot.lane.b32.xlu0 %v243, 113
        %v273 = vpop.permute.xlu0 %272
        %276 = vrot.lane.b32.xlu0 %v242, 1
        %v277 = vpop.permute.xlu0 %276
        %278 = vrot.lane.b32.xlu0 %v243, 1
        %v279 = vpop.permute.xlu0 %278
        %vm282 = vcmask 7168
        %v283 = vsel %vm282, %v271, %v277
        %v284 = vsel %vm282, %v273, %v279
        %v285 = vadd.f32 %v242, %v283
        %v286 = vadd.f32 %v243, %v284
        %v288 = vrot.slane %v286, 7
        %vm291 = vcmask 1040384
        %v292 = vrot.slane %v285, 7
        %v293 = vsel %vm291, %v292, %v288
        %v296 = vsel %vm291, %v288, %v292
        %v297 = vadd.f32 %v285, %v296
        %v298 = vadd.f32 %v286, %v293
        %v299 = vmul.f32 %v297, 0.25
        %v300 = vmul.f32 %v298, 0.25
        %v301 = vand.u32 %v264, 1
        %v302 = vcvt.s32.f32 %v301
        %v303 = vand.u32 %v266, 1
        %v304 = vand.u32 %v267, 1
        %v305 = vcvt.s32.f32 %v303
        %v306 = vcvt.s32.f32 %v304
        %s307 = sld [smem:[%s225 + $0x1]]
        %v308 = vmul.f32 %v299, %v302
        %v309 = vmul.f32 %v300, %v302
        %v310 = vmul.f32 %v308, %v305
        %v311 = vmul.f32 %v309, %v306
        %v312 = vand.u32 2147483647, %v310
        %v313 = vand.u32 2147483647, %v311
        %v314 = vsel %vm247, %v312, 0.0
        %v315 = vsel %vm247, %v313, 0.0
        %v316 = vadd.f32 %v314, %v315
        %317 = vadd.xlane.f32.xlu0 %v316
        %v318 = vpop.xlane.xlu0 %317
        %v319 = vrot.slane %v318, 4
        %v320 = vadd.f32 %v318, %v319
        %v321 = vrot.slane %v320, 2
        %v322 = vadd.f32 %v320, %v321
        %v323 = vrot.slane %v322, 1
        %v324 = vadd.f32 %v322, %v323
        %s325 = vtos %v324
        %s326 = sadd.f32 %s307, %s325
        %s327 = scalar_lea.smem %s225, 1 [#allocation7]
        %328 = sst [smem:[%s327]] %s326
        %331 = vrot.lane.b32.xlu0 %v299, 114
        %v332 = vpop.permute.xlu0 %331
        %333 = vrot.lane.b32.xlu0 %v300, 114
        %v334 = vpop.permute.xlu0 %333
        %337 = vrot.lane.b32.xlu0 %v299, 2
        %v338 = vpop.permute.xlu0 %337
        %339 = vrot.lane.b32.xlu0 %v300, 2
        %v340 = vpop.permute.xlu0 %339
        %vm343 = vcmask 15360
        %v344 = vsel %vm343, %v332, %v338
        %v345 = vsel %vm343, %v334, %v340
        %v346 = vadd.f32 %v299, %v344
        %v347 = vadd.f32 %v300, %v345
        %v349 = vrot.slane %v347, 6
        %vm352 = vcmask 1041408
        %v353 = vrot.slane %v346, 6
        %v354 = vsel %vm352, %v353, %v349
        %v357 = vsel %vm352, %v349, %v353
        %v358 = vadd.f32 %v346, %v357
        %v359 = vadd.f32 %v347, %v354
        %v360 = vmul.f32 %v358, 0.25
        %v361 = vmul.f32 %v359, 0.25
        %v362 = vand.u32 %v264, 3
        %vm363 = vcmp.eq.s32.totalorder %v362, 3
        %v364 = vsel %vm363, 1, 0
        %v365 = vcvt.s32.f32 %v364
        %v366 = vand.u32 %v266, 3
        %v367 = vand.u32 %v267, 3
        %vm368 = vcmp.eq.s32.totalorder %v366, 3
        %vm369 = vcmp.eq.s32.totalorder %v367, 3
        %v370 = vsel %vm368, 1, 0
        %v371 = vsel %vm369, 1, 0
        %v372 = vcvt.s32.f32 %v370
        %v373 = vcvt.s32.f32 %v371
        %s374 = sld [smem:[%s225 + $0x2]]
        %v375 = vmul.f32 %v360, %v365
        %v376 = vmul.f32 %v361, %v365
        %v377 = vmul.f32 %v375, %v372
        %v378 = vmul.f32 %v376, %v373
        %v379 = vand.u32 2147483647, %v377
        %v380 = vand.u32 2147483647, %v378
        %v381 = vsel %vm247, %v379, 0.0
        %v382 = vsel %vm247, %v380, 0.0
        %v383 = vadd.f32 %v381, %v382
        %384 = vadd.xlane.f32.xlu0 %v383
        %v385 = vpop.xlane.xlu0 %384
        %v386 = vrot.slane %v385, 4
        %v387 = vadd.f32 %v385, %v386
        %v388 = vrot.slane %v387, 2
        %v389 = vadd.f32 %v387, %v388
        %v390 = vrot.slane %v389, 1
        %v391 = vadd.f32 %v389, %v390
        %s392 = vtos %v391
        %s393 = sadd.f32 %s374, %s392
        %s394 = scalar_lea.smem %s225, 2 [#allocation7]
        %395 = sst [smem:[%s394]] %s393
        %s396 = sand.u32 %s98, 1
        %s397 = scalar_lea.sflag [#allocation4], %s396
        %s398 = sand.u32 %s98, 1
        %s399 = smul.addr %s398, 128
        %s400 = scalar_lea.smem [#allocation7], %s399
        // Predicated region
        $region41: #{tpu_custom_call.1} parent=27 // pred_check
          %p401 = pneg %p108
        $region42: #{tpu_custom_call.1} parent=27 // pred_check_branch
          %403 = sbr.rel (%p401) target = $region44
        $region43: #{tpu_custom_call.1} parent=27 // pred_region
          %405 = vsyncadd %s397, 0
          %s406 = scalar_lea.vmem %s2, %s26
          %s408 = sshll.u32 %s406, 4
          %s409 = int_to_ptr.vmem [resolvable:$true] %s408
          %411 = dma.smem_to_vmem %s400, 16, %s409, %s397
        $region44: #{tpu_custom_call.1} parent=27 // pred_fallthru
          _
      $region28: #{tpu_custom_call.1} parent=5 // pred_fallthru
        _
      %p412 = scmp.le.s32.totalorder 2, %s17
      // Predicated region
      $region45: #{tpu_custom_call.1} parent=5 // pred_check
        %p413 = pneg %p412
      $region46: #{tpu_custom_call.1} parent=5 // pred_check_branch
        %415 = sbr.rel (%p413) target = $region48
      $region47: #{tpu_custom_call.1} parent=5 // pred_region
        %s416 = ssub.s32 %s17, 2
        // Predicated region
        $region49: #{tpu_custom_call.1} parent=47 // pred_check
          %p417 = pneg %p114
        $region50: #{tpu_custom_call.1} parent=47 // pred_check_branch
          %419 = sbr.rel (%p417) target = $region52
        $region51: #{tpu_custom_call.1} parent=47 // pred_region
          %s420 = sand.u32 %s99, 1
          %s421 = scalar_lea.sflag [#allocation4], %s420
          %s422 = sand.u32 %s99, 1
          %s423 = smul.addr %s422, 128
          %s424 = scalar_lea.smem [#allocation7], %s423
          %426 = dma.done %s421, 16
        $region52: #{tpu_custom_call.1} parent=47 // pred_fallthru
          _
        %427 = sfence
      $region48: #{tpu_custom_call.1} parent=5 // pred_fallthru
        _
    $region6: #{tpu_custom_call.1} parent=1 // loop_footer
      %s21 = sadd.s32 1, %s17
    $region7: #{tpu_custom_call.1} parent=1 // loop_footer_branch
      %16 = sbr.rel target = $region3
    $region8: #{tpu_custom_call.1} parent=1 // loop_exit
      _
    %428 = vsyncpa [#allocation3], 1
    %s429 = scalar_lea.sflag [#allocation3], 1
    %430 = vsyncpa %s429, 1
    %431 = vsyncpa [#allocation6], 1
    %s432 = scalar_lea.sflag [#allocation6], 1
    %433 = vsyncpa %s432, 1
    %434 = vsyncpa [#allocation4], 1
    %s435 = scalar_lea.sflag [#allocation4], 1
    %436 = vsyncpa %s435, 1

</llo_original>
